<compile_context>
chip_gen: v7x
topology: tpu7x:2x2x1
jax: 0.10.0
libtpu: 0.0.40
codegen_flags: <defaults>
</compile_context>

<pallas_src>
import jax
import jax.numpy as jnp
from jax.experimental import pallas as pl
from jax.experimental.pallas import tpu as pltpu

_LANE = 128  # vreg lane width


def _ohem_elem_kernel(p_ref, g_ref, o_ref):
    """Per-element OHEM regression loss over one lane-dense row tile."""
    p = p_ref[...].astype(jnp.float32)
    g = g_ref[...].astype(jnp.float32)
    # pos_inds = (g > 0); predict is masked, groundth is not.
    masked_p = jnp.where(g > jnp.float32(0.0), p, jnp.float32(0.0))
    o_ref[...] = jnp.abs(masked_p - g)


def _elementwise_ohem_losses(predict: jax.Array, groundth: jax.Array,
                             *, max_row_block: int = 4096) -> jax.Array:
    """Flattened per-element loss |predict*pos - groundth| in float32."""
    assert predict.shape == groundth.shape, "predict/groundth shape mismatch"

    total = predict.size
    rows = pl.cdiv(total, _LANE)
    lane_total = rows * _LANE

    p_flat = predict.reshape(-1)
    g_flat = groundth.reshape(-1)
    if lane_total != total:
        # Zero padding => masked_p == 0 and g == 0 => loss == 0 at padded
        # slots; it cannot change a top-k sum of non-negative losses.
        p_flat = jnp.pad(p_flat, (0, lane_total - total))
        g_flat = jnp.pad(g_flat, (0, lane_total - total))
    p2 = p_flat.reshape(rows, _LANE)
    g2 = g_flat.reshape(rows, _LANE)

    # Block is either the whole array (block == full dim, always legal) or an
    # (8,128)-aligned 4096x128 tile; Pallas masks the partial final block, so
    # no row_block-granularity padding is needed on the wrapper side.
    row_block = rows if rows <= max_row_block else max_row_block
    grid = (pl.cdiv(rows, row_block),)

    out = pl.pallas_call(
        _ohem_elem_kernel,
        out_shape=jax.ShapeDtypeStruct((rows, _LANE), jnp.float32),
        grid_spec=pltpu.PrefetchScalarGridSpec(
            num_scalar_prefetch=0,
            grid=grid,
            in_specs=[
                pl.BlockSpec((row_block, _LANE), lambda i: (i, 0)),
                pl.BlockSpec((row_block, _LANE), lambda i: (i, 0)),
            ],
            out_specs=pl.BlockSpec((row_block, _LANE), lambda i: (i, 0)),
        ),
        compiler_params=pltpu.CompilerParams(
            # Purely elementwise, per-tile-independent output -> parallel grid
            # (lets Mosaic shard the loop across both TensorCores on v7x).
            dimension_semantics=("parallel",),
        ),
    )(p2, g2)

    losses = out.reshape(-1)
    if lane_total != total:
        losses = losses[:total]
    return losses


def _top_k_sum(losses: jax.Array, k: int, *, segment: int = 8192) -> jax.Array:
    """Sum of the k largest entries of a non-negative 1-D loss array."""
    n = losses.shape[0]
    if k >= n:
        return jnp.sum(losses.astype(jnp.float32))
    if k >= segment or n <= 4 * segment:
        vals, _ = jax.lax.top_k(losses, k)
        return jnp.sum(vals.astype(jnp.float32))
    # Exact two-level selection: each segment contributes at most k elements
    # to the global top-k, so the per-segment top-k candidate set always
    # contains the global top-k.
    num_seg = pl.cdiv(n, segment)
    padded = num_seg * segment
    if padded != n:
        # losses >= 0, so zero padding can never displace a larger value.
        losses = jnp.pad(losses, (0, padded - n))
    cand = jax.lax.top_k(losses.reshape(num_seg, segment), k)[0].reshape(-1)
    vals, _ = jax.lax.top_k(cand, k)
    return jnp.sum(vals.astype(jnp.float32))


def ohem_se_loss(predict: jax.Array, groundth: jax.Array, keep_num: int,
                 *, rate: float = 0.5) -> jax.Array:
    """Pallas implementation of OHEMSELoss.forward. Returns a scalar float32."""
    losses = _elementwise_ohem_losses(predict, groundth)
    # int(rate * keep_num) can be 0 (keep_num < 2) -> guard the division.
    k = max(1, int(rate * keep_num))
    return _top_k_sum(losses, k) / jnp.float32(k)


def ohem_se_loss_ref(predict, groundth, keep_num, rate=0.5):
    """Pure-JAX reference matching the PyTorch module exactly."""
    pos_inds = (groundth > 0).astype(jnp.float32)
    p = predict * pos_inds
    loss = jnp.abs(p - groundth).reshape(-1)
    k = max(1, int(rate * keep_num))
    sorted_desc = jnp.sort(loss)[::-1]
    return jnp.sum(sorted_desc[:k]) / jnp.float32(k)


if __name__ == "__main__":
    key = jax.random.PRNGKey(0)
    k1, k2, k3 = jax.random.split(key, 3)

    # Small detection-style regression target: (batch, channels, H, W).
    B, C, H, W = 2, 4, 16, 16
    predict = jax.random.normal(k1, (B, C, H, W), dtype=jnp.float32)
    # groundth: positive regression targets where an object is present, else 0.
    gvals = jnp.abs(jax.random.normal(k2, (B, C, H, W), dtype=jnp.float32)) + 0.1
    present = jax.random.bernoulli(k3, 0.5, (B, C, H, W))
    groundth = jnp.where(present, gvals, jnp.float32(0.0))
    keep_num = 256  # -> keeps the 128 hardest examples

    loss = ohem_se_loss(predict, groundth, keep_num)
    jax.block_until_ready(loss)

    ref = ohem_se_loss_ref(predict, groundth, keep_num)
    assert jnp.allclose(loss, ref, rtol=1e-5, atol=1e-5), (loss, ref)

    print("KERNEL_OK")
</pallas_src>

<mosaic_0001>
module attributes {stable_mosaic.version = 11 : i64} {
  func.func @_ohem_elem_kernel(%arg0: i32, %arg1: memref<16x128xf32, #tpu.memory_space<vmem>>, %arg2: memref<16x128xf32, #tpu.memory_space<vmem>>, %arg3: memref<16x128xf32, #tpu.memory_space<vmem>>) attributes {dimension_semantics = [#tpu.dimension_semantics<parallel>], iteration_bounds = array<i64: 1>, scalar_prefetch = 0 : i64, scratch_operands = 0 : i64, tpu.core_type = #tpu.core_type<tc>, window_params = [{transform_indices = @transform_0, window_bounds = array<i64: 16, 128>}, {transform_indices = @transform_1, window_bounds = array<i64: 16, 128>}, {transform_indices = @transform_2, window_bounds = array<i64: 16, 128>}]} {
    %c0 = arith.constant 0 : index
    %c0_0 = arith.constant 0 : index
    %0 = vector.load %arg1[%c0, %c0_0] : memref<16x128xf32, #tpu.memory_space<vmem>>, vector<16x128xf32>
    %c0_1 = arith.constant 0 : index
    %c0_2 = arith.constant 0 : index
    %1 = vector.load %arg2[%c0_1, %c0_2] : memref<16x128xf32, #tpu.memory_space<vmem>>, vector<16x128xf32>
    %cst = arith.constant 0.000000e+00 : f32
    %2 = vector.broadcast %cst : f32 to vector<16x128xf32>
    %3 = arith.cmpf ogt, %1, %2 : vector<16x128xf32>
    %cst_3 = arith.constant 0.000000e+00 : f32
    %4 = vector.broadcast %cst_3 : f32 to vector<16x128xf32>
    %5 = arith.select %3, %0, %4 : vector<16x128xi1>, vector<16x128xf32>
    %6 = arith.subf %5, %1 : vector<16x128xf32>
    %7 = math.absf %6 : vector<16x128xf32>
    %c0_4 = arith.constant 0 : index
    %c0_5 = arith.constant 0 : index
    %8 = vector.load %arg3[%c0_4, %c0_5] : memref<16x128xf32, #tpu.memory_space<vmem>>, vector<16x128xf32>
    tpu.vector_store %arg3[%c0_4, %c0_5], %7 {strides = array<i32>} : memref<16x128xf32, #tpu.memory_space<vmem>>, vector<16x128xf32>,
    return
  }
  func.func @transform_0(%arg0: i32) -> (i32, i32) {
    %c0_i32 = arith.constant 0 : i32
    %c0_i32_0 = arith.constant 0 : i32
    return %arg0, %c0_i32 : i32, i32
  }
  func.func @transform_1(%arg0: i32) -> (i32, i32) {
    %c0_i32 = arith.constant 0 : i32
    %c0_i32_0 = arith.constant 0 : i32
    return %arg0, %c0_i32 : i32, i32
  }
  func.func @transform_2(%arg0: i32) -> (i32, i32) {
    %c0_i32 = arith.constant 0 : i32
    %c0_i32_0 = arith.constant 0 : i32
    return %arg0, %c0_i32 : i32, i32
  }
}

</mosaic_0001>

<llo_original>
// kernel: tpu_custom_call.1
$region0: #{tpu_custom_call.1}
  #allocation0 [shape = 'u32[]', space=smem, size = 0x4, offset = 0x4, fixed_abs, tag = 'smem constant byte address 0x4 - core index']
  #allocation1 [shape = 'u32[144,128]{1,0:T(1,128)}', space=vmem, size = 0x12000, scoped, tag = 'internal scratch']
  %s0 = inlined_call_operand.hbm [shape: f32[16,128], index: 0, kind: input, shape index: {}]
  %s1 = inlined_call_operand.hbm [shape: f32[16,128], index: 1, kind: input, shape index: {}]
  %s2 = inlined_call_operand.hbm [shape: f32[16,128], index: 2, kind: output, shape index: {}]
  %s3 = sld [smem:[#allocation0]]
  $region26: #{tpu_custom_call.1} parent=0
    _
  %s5 = ssub.s32 1, %s3
  %s6 = scalar_select 0, %s5, %s3
  $region1: #{tpu_custom_call.1} parent=0
    #allocation2 [shape = 'u8[8192]{0}', space=vmem, size = 0x2000, scoped, tag = 'input window, operand 0, single buffered']
    #allocation3 [shape = 's32[1]{0}', space=sflag, size = 0x4, scoped, tag = 'scoped memory for tpu_custom_call.1']
    #allocation4 [shape = 's32[1]{0}', space=sflag, size = 0x4, scoped, tag = 'scoped memory for tpu_custom_call.1']
    #allocation5 [shape = 'u8[8192]{0}', space=vmem, size = 0x2000, scoped, tag = 'input window, operand 1, single buffered']
    #allocation6 [shape = 's32[1]{0}', space=sflag, size = 0x4, scoped, tag = 'scoped memory for tpu_custom_call.1']
    #allocation7 [shape = 'u8[8192]{0}', space=vmem, size = 0x2000, scoped, tag = 'output window, operand 0, single buffered']
    %7 = vsyncpa [#allocation3], 0
    %8 = vsyncpa [#allocation6], 0
    %9 = vsyncpa [#allocation4], 0
    // Predicated region
    $region2: #{tpu_custom_call.1} parent=1 // pred_check
      _
    $region3: #{tpu_custom_call.1} parent=1 // pred_check_branch
      %11 = sbr.rel (0) target = $region5
    $region4: #{tpu_custom_call.1} parent=1 // pred_region
      %s13 = ssub.s32 256, 256
      %14 = vsyncadd [#allocation3], %s13
      %s15 = sshll.u32 [#allocation2], 4
      %s16 = int_to_ptr.vmem [resolvable:$true] %s15
      %21 = dma.hbm_to_vmem [thread:$0]  %s0, 256, %s16, [#allocation3], 128, 128, 8
    $region5: #{tpu_custom_call.1} parent=1 // pred_fallthru
      _
    // Predicated region
    $region6: #{tpu_custom_call.1} parent=1 // pred_check
      _
    $region7: #{tpu_custom_call.1} parent=1 // pred_check_branch
      %23 = sbr.rel (0) target = $region9
    $region8: #{tpu_custom_call.1} parent=1 // pred_region
      %s25 = ssub.s32 256, 256
      %26 = vsyncadd [#allocation6], %s25
      %s27 = sshll.u32 [#allocation5], 4
      %s28 = int_to_ptr.vmem [resolvable:$true] %s27
      %33 = dma.hbm_to_vmem [thread:$0]  %s1, 256, %s28, [#allocation6], 128, 128, 8
    $region9: #{tpu_custom_call.1} parent=1 // pred_fallthru
      _
    // Predicated region
    $region10: #{tpu_custom_call.1} parent=1 // pred_check
      _
    $region11: #{tpu_custom_call.1} parent=1 // pred_check_branch
      %35 = sbr.rel (0) target = $region13
    $region12: #{tpu_custom_call.1} parent=1 // pred_region
      %36 = dma.done [#allocation3], 256
    $region13: #{tpu_custom_call.1} parent=1 // pred_fallthru
      _
    // Predicated region
    $region14: #{tpu_custom_call.1} parent=1 // pred_check
      _
    $region15: #{tpu_custom_call.1} parent=1 // pred_check_branch
      %38 = sbr.rel (0) target = $region17
    $region16: #{tpu_custom_call.1} parent=1 // pred_region
      %39 = dma.done [#allocation6], 256
    $region17: #{tpu_custom_call.1} parent=1 // pred_fallthru
      _
    %v40 = vld [vmem:[#allocation2] sm:$0xff]
    %v41 = vld [vmem:[#allocation2 + $0x8] sm:$0xff]
    %v42 = vld [vmem:[#allocation5] sm:$0xff]
    %v43 = vld [vmem:[#allocation5 + $0x8] sm:$0xff]
    %vm44 = vcmp.gt.f32.partialorder %v42, 0.0
    %vm45 = vcmp.gt.f32.partialorder %v43, 0.0
    %v46 = vsel %vm44, %v40, 0.0
    %v47 = vsel %vm45, %v41, 0.0
    %v48 = vsub.f32 %v46, %v42
    %v49 = vsub.f32 %v47, %v43
    %v50 = vand.u32 2147483647, %v48
    %v51 = vand.u32 2147483647, %v49
    %52 = vst [vmem:[#allocation7] sm:$0xff] %v50
    %53 = vst [vmem:[#allocation7 + $0x8] sm:$0xff] %v51
    // Predicated region
    $region18: #{tpu_custom_call.1} parent=1 // pred_check
      _
    $region19: #{tpu_custom_call.1} parent=1 // pred_check_branch
      %55 = sbr.rel (0) target = $region21
    $region20: #{tpu_custom_call.1} parent=1 // pred_region
      %s57 = ssub.s32 256, 256
      %58 = vsyncadd [#allocation4], %s57
      %s59 = sshll.u32 [#allocation7], 4
      %s60 = int_to_ptr.vmem [resolvable:$true] %s59
      %65 = dma.vmem_to_hbm [thread:$0]  %s60, 256, %s2, [#allocation4], 128, 128, 8
    $region21: #{tpu_custom_call.1} parent=1 // pred_fallthru
      _
    // Predicated region
    $region22: #{tpu_custom_call.1} parent=1 // pred_check
      _
    $region23: #{tpu_custom_call.1} parent=1 // pred_check_branch
      %67 = sbr.rel (0) target = $region25
    $region24: #{tpu_custom_call.1} parent=1 // pred_region
      %68 = dma.done [#allocation4], 256
    $region25: #{tpu_custom_call.1} parent=1 // pred_fallthru
      _
    %69 = vsyncpa [#allocation3], 1
    %70 = vsyncpa [#allocation6], 1
    %71 = vsyncpa [#allocation4], 1

</llo_original>
